<compile_context>
chip_gen: v5e
topology: v5e:2x2
jax: 0.10.0
libtpu: 0.0.40
codegen_flags: <defaults>
</compile_context>

<pallas_src>
import functools

import jax
import jax.numpy as jnp
from jax.experimental import pallas as pl
from jax.experimental.pallas import tpu as pltpu


def _round_up(x, m):
    return (x + m - 1) // m * m


def _label_smoothing_kernel(pred_ref, tgt_ref, out_ref, *,
                            smoothing, vocab_size, ignore_index, n_rows):
    # pred_ref: (row_tile, V) logits block for this grid step (native dtype).
    # tgt_ref:  (row_tile, 1) int32 targets for this block.
    # out_ref:  (1, 1, 1) per-block partial sum (unnormalized).
    tn, v = pred_ref.shape
    i = pl.program_id(0)

    x = pred_ref[...]                                             # (TN, V)
    tgt = tgt_ref[...]                                            # (TN, 1) int32

    # Pass 1: reductions directly over the raw logits.
    m = jnp.max(x, axis=-1, keepdims=True).astype(jnp.float32)    # (TN, 1)
    sum_x = jnp.sum(x.astype(jnp.float32), axis=-1, keepdims=True)

    lane = jax.lax.broadcasted_iota(jnp.int32, (tn, v), 1)        # (TN, V)
    onehot = lane == tgt                                          # broadcast (TN,1)
    x_tgt = jnp.sum(jnp.where(onehot, x, 0).astype(jnp.float32),
                    axis=-1, keepdims=True)                       # (TN, 1)

    # Pass 2: logsumexp denominator (f32 inside exp/log).
    lse = jnp.log(jnp.sum(jnp.exp(x.astype(jnp.float32) - m),
                          axis=-1, keepdims=True))                # (TN, 1)

    # Algebraic form of sum_v(-true_dist * logp):
    #   row_loss     = -(fill * sum_v(logp) + (conf - fill) * logp[target])
    #   sum_v(logp)  = sum_v(x) - V*m - V*lse
    #   logp[target] = x[target] - m - lse
    vf = jnp.float32(v)
    sum_logp = sum_x - vf * m - vf * lse                          # (TN, 1)
    logp_tgt = x_tgt - m - lse                                    # (TN, 1)

    fill = jnp.float32(smoothing / (vocab_size - 2))
    conf = jnp.float32(1.0 - smoothing)
    row_loss = -(fill * sum_logp + (conf - fill) * logp_tgt)      # (TN, 1)

    # Tail rows of the ragged last block and ignore_index rows contribute 0.
    # jnp.where (not a multiply) so garbage/NaN tail logits cannot poison it.
    row_id = i * tn + jax.lax.broadcasted_iota(jnp.int32, (tn, 1), 0)
    valid = (row_id < n_rows) & (tgt != ignore_index)             # (TN, 1)
    block_sum = jnp.sum(jnp.where(valid, row_loss, 0.0))          # scalar

    out_ref[...] = jnp.full((1, 1, 1), block_sum, dtype=jnp.float32)


def label_smoothing_loss(pred, target, *, smoothing=0.1, vocab_size=None,
                         ignore_index=-100, row_tile=None):
    """pred: (N, V) float (f32 or bf16); target: (N,) int. Scalar f32 loss."""
    n, v = pred.shape
    if vocab_size is None:
        vocab_size = v

    if row_tile is None:
        # ~1M f32 elements (~4 MiB f32 working set) per block: big enough to
        # sit near the HBM roofline, small enough that the double-buffered
        # input + in-kernel f32 temps stay well inside the 32 MiB scoped VMEM
        # on every generation (incl. v7x's 64 MiB/TC physical).
        row_tile = (1 << 20) // v
        row_tile = max(8, min(8192, row_tile // 8 * 8))
    # Guarantee >= 2 grid blocks whenever possible so the "parallel" axis can
    # span both v7x TensorCores; no effect on v5e/v6e (single TC).
    if n > 8:
        row_tile = min(row_tile, _round_up(pl.cdiv(n, 2), 8))
    row_tile = min(row_tile, _round_up(n, 8))

    num_blocks = pl.cdiv(n, row_tile)

    tgt2d = target.astype(jnp.int32).reshape(n, 1)

    kernel = functools.partial(
        _label_smoothing_kernel,
        smoothing=float(smoothing),
        vocab_size=int(vocab_size),
        ignore_index=int(ignore_index),
        n_rows=int(n),
    )

    partials = pl.pallas_call(
        kernel,
        out_shape=jax.ShapeDtypeStruct((num_blocks, 1, 1), jnp.float32),
        grid_spec=pltpu.PrefetchScalarGridSpec(
            num_scalar_prefetch=0,
            grid=(num_blocks,),
            in_specs=[
                pl.BlockSpec((row_tile, v), lambda i: (i, 0)),
                pl.BlockSpec((row_tile, 1), lambda i: (i, 0)),
            ],
            out_specs=pl.BlockSpec((1, 1, 1), lambda i: (i, 0, 0)),
        ),
        compiler_params=pltpu.CompilerParams(
            dimension_semantics=("parallel",),
            vmem_limit_bytes=32 * 1024 * 1024),
    )(pred, tgt2d)

    # Final mean over ALL original rows (masked rows count in the denominator,
    # exactly like torch.mean over the per-row sums). Single divide at the end.
    return jnp.sum(partials) / jnp.float32(n)


def _reference(pred, target, smoothing, vocab_size, ignore_index):
    logp = jax.nn.log_softmax(pred.astype(jnp.float32), axis=-1)
    n, v = pred.shape
    fill = smoothing / (vocab_size - 2)
    onehot = jax.nn.one_hot(target, v, dtype=jnp.float32)
    true_dist = onehot * (1.0 - smoothing) + (1.0 - onehot) * fill
    mask = (target != ignore_index).astype(jnp.float32)[:, None]
    true_dist = true_dist * mask
    return jnp.mean(jnp.sum(-true_dist * logp, axis=-1))


if __name__ == "__main__":
    key = jax.random.PRNGKey(0)
    SMOOTHING = 0.1
    IGNORE_INDEX = -100

    # Case 1: small aligned shapes (16 examples, vocab 128) -> 2 grid blocks.
    k1, k2, k3, k4 = jax.random.split(key, 4)
    N1, V1 = 16, 128
    pred1 = jax.random.normal(k1, (N1, V1), dtype=jnp.float32)
    target1 = jax.random.randint(k2, (N1,), 0, V1, dtype=jnp.int32)
    target1 = target1.at[3].set(IGNORE_INDEX).at[10].set(IGNORE_INDEX)

    loss1 = label_smoothing_loss(pred1, target1, smoothing=SMOOTHING,
                                 vocab_size=V1, ignore_index=IGNORE_INDEX)
    loss1 = jax.block_until_ready(loss1)
    ref1 = _reference(pred1, target1, SMOOTHING, V1, IGNORE_INDEX)
    assert jnp.allclose(loss1, ref1, rtol=1e-4, atol=1e-4), (loss1, ref1)

    # Case 2: non-multiple-of-8 row count exercises the ragged-tail masking.
    N2, V2 = 13, 256
    pred2 = jax.random.normal(k3, (N2, V2), dtype=jnp.float32)
    target2 = jax.random.randint(k4, (N2,), 0, V2, dtype=jnp.int32)
    target2 = target2.at[0].set(IGNORE_INDEX)

    loss2 = label_smoothing_loss(pred2, target2, smoothing=SMOOTHING,
                                 vocab_size=V2, ignore_index=IGNORE_INDEX)
    loss2 = jax.block_until_ready(loss2)
    ref2 = _reference(pred2, target2, SMOOTHING, V2, IGNORE_INDEX)
    assert jnp.allclose(loss2, ref2, rtol=1e-4, atol=1e-4), (loss2, ref2)

    # Case 3: bf16 logits exercise the native-dtype (no whole-block cast) path.
    pred3 = pred1.astype(jnp.bfloat16)
    loss3 = label_smoothing_loss(pred3, target1, smoothing=SMOOTHING,
                                 vocab_size=V1, ignore_index=IGNORE_INDEX)
    loss3 = jax.block_until_ready(loss3)
    ref3 = _reference(pred3, target1, SMOOTHING, V1, IGNORE_INDEX)
    assert jnp.allclose(loss3, ref3, rtol=2e-3, atol=2e-3), (loss3, ref3)

    print("KERNEL_OK")
</pallas_src>

<mosaic_0001>
module attributes {stable_mosaic.version = 11 : i64} {
  func.func @_label_smoothing_kernel(%arg0: i32, %arg1: memref<8x128xf32, #tpu.memory_space<vmem>>, %arg2: memref<8x1xi32, #tpu.memory_space<vmem>>, %arg3: memref<1x1x1xf32, #tpu.memory_space<vmem>>) attributes {dimension_semantics = [#tpu.dimension_semantics<parallel>], iteration_bounds = array<i64: 2>, scalar_prefetch = 0 : i64, scratch_operands = 0 : i64, tpu.core_type = #tpu.core_type<tc>, window_params = [{transform_indices = @transform_0, window_bounds = array<i64: 8, 128>}, {transform_indices = @transform_1, window_bounds = array<i64: 8, 1>}, {transform_indices = @transform_2, window_bounds = array<i64: 1, 1, 1>}]} {
    %c0 = arith.constant 0 : index
    %c0_0 = arith.constant 0 : index
    %0 = vector.load %arg1[%c0, %c0_0] : memref<8x128xf32, #tpu.memory_space<vmem>>, vector<8x128xf32>
    %c0_1 = arith.constant 0 : index
    %c0_2 = arith.constant 0 : index
    %1 = vector.load %arg2[%c0_1, %c0_2] : memref<8x1xi32, #tpu.memory_space<vmem>>, vector<8x1xi32>
    %cst = arith.constant dense<0xFF800000> : vector<8xf32>
    %2 = vector.multi_reduction <maximumf>, %0, %cst [1] : vector<8x128xf32> to vector<8xf32>
    %3 = vector.shape_cast %2 : vector<8xf32> to vector<8x1xf32>
    %cst_3 = arith.constant dense<0.000000e+00> : vector<8xf32>
    %4 = vector.multi_reduction <add>, %0, %cst_3 [1] : vector<8x128xf32> to vector<8xf32>
    %5 = vector.shape_cast %4 : vector<8xf32> to vector<8x1xf32>
    %6 = tpu.iota {dimensions = array<i32: 1>} : vector<8x128xi32>
    %7 = vector.broadcast %1 : vector<8x1xi32> to vector<8x128xi32>
    %8 = arith.cmpi eq, %6, %7 : vector<8x128xi32>
    %c0_i32 = arith.constant 0 : i32
    %9 = arith.sitofp %c0_i32 : i32 to f32
    %10 = vector.broadcast %9 : f32 to vector<8x128xf32>
    %11 = arith.select %8, %0, %10 : vector<8x128xi1>, vector<8x128xf32>
    %cst_4 = arith.constant dense<0.000000e+00> : vector<8xf32>
    %12 = vector.multi_reduction <add>, %11, %cst_4 [1] : vector<8x128xf32> to vector<8xf32>
    %13 = vector.shape_cast %12 : vector<8xf32> to vector<8x1xf32>
    %14 = vector.broadcast %3 : vector<8x1xf32> to vector<8x128xf32>
    %15 = arith.subf %0, %14 : vector<8x128xf32>
    %16 = math.exp %15 : vector<8x128xf32>
    %cst_5 = arith.constant dense<0.000000e+00> : vector<8xf32>
    %17 = vector.multi_reduction <add>, %16, %cst_5 [1] : vector<8x128xf32> to vector<8xf32>
    %18 = vector.shape_cast %17 : vector<8xf32> to vector<8x1xf32>
    %19 = math.log %18 : vector<8x1xf32>
    %cst_6 = arith.constant 1.280000e+02 : f32
    %20 = vector.broadcast %cst_6 : f32 to vector<8x1xf32>
    %21 = arith.mulf %20, %3 : vector<8x1xf32>
    %22 = arith.subf %5, %21 : vector<8x1xf32>
    %cst_7 = arith.constant 1.280000e+02 : f32
    %23 = vector.broadcast %cst_7 : f32 to vector<8x1xf32>
    %24 = arith.mulf %23, %19 : vector<8x1xf32>
    %25 = arith.subf %22, %24 : vector<8x1xf32>
    %26 = arith.subf %13, %3 : vector<8x1xf32>
    %27 = arith.subf %26, %19 : vector<8x1xf32>
    %cst_8 = arith.constant 7.93650805E-4 : f32
    %28 = vector.broadcast %cst_8 : f32 to vector<8x1xf32>
    %29 = arith.mulf %28, %25 : vector<8x1xf32>
    %cst_9 = arith.constant 0.899999976 : f32
    %cst_10 = arith.constant 7.93650805E-4 : f32
    %30 = arith.subf %cst_9, %cst_10 : f32
    %31 = vector.broadcast %30 : f32 to vector<8x1xf32>
    %32 = arith.mulf %31, %27 : vector<8x1xf32>
    %33 = arith.addf %29, %32 : vector<8x1xf32>
    %cst_11 = arith.constant 0.000000e+00 : f32
    %34 = vector.broadcast %cst_11 : f32 to vector<8x1xf32>
    %35 = arith.subf %34, %33 : vector<8x1xf32>
    %c8_i32 = arith.constant 8 : i32
    %36 = arith.muli %arg0, %c8_i32 : i32
    %37 = tpu.iota {dimensions = array<i32: 0>} : vector<8x1xi32>
    %38 = vector.broadcast %36 : i32 to vector<8x1xi32>
    %39 = arith.addi %38, %37 : vector<8x1xi32>
    %c16_i32 = arith.constant 16 : i32
    %40 = vector.broadcast %c16_i32 : i32 to vector<8x1xi32>
    %41 = arith.cmpi slt, %39, %40 : vector<8x1xi32>
    %c-100_i32 = arith.constant -100 : i32
    %42 = vector.broadcast %c-100_i32 : i32 to vector<8x1xi32>
    %43 = arith.cmpi ne, %1, %42 : vector<8x1xi32>
    %44 = arith.andi %41, %43 : vector<8x1xi1>
    %cst_12 = arith.constant 0.000000e+00 : f32
    %45 = vector.broadcast %cst_12 : f32 to vector<8x1xf32>
    %46 = arith.select %44, %35, %45 : vector<8x1xi1>, vector<8x1xf32>
    %47 = vector.shape_cast %46 : vector<8x1xf32> to vector<1x8x1xf32>
    %cst_13 = arith.constant dense<0.000000e+00> : vector<1xf32>
    %48 = vector.multi_reduction <add>, %47, %cst_13 [1, 2] : vector<1x8x1xf32> to vector<1xf32>
    %49 = vector.shape_cast %48 : vector<1xf32> to vector<1x1x1xf32>
    %50 = vector.extract %49[0, 0, 0] : f32 from vector<1x1x1xf32>
    %51 = vector.broadcast %50 : f32 to vector<1x1x1xf32>
    %c0_14 = arith.constant 0 : index
    %c0_15 = arith.constant 0 : index
    %c0_16 = arith.constant 0 : index
    %52 = vector.load %arg3[%c0_14, %c0_15, %c0_16] : memref<1x1x1xf32, #tpu.memory_space<vmem>>, vector<1x1x1xf32>
    tpu.vector_store %arg3[%c0_14, %c0_15, %c0_16], %51 {strides = array<i32>} : memref<1x1x1xf32, #tpu.memory_space<vmem>>, vector<1x1x1xf32>,
    return
  }
  func.func @transform_0(%arg0: i32) -> (i32, i32) {
    %c0_i32 = arith.constant 0 : i32
    %c0_i32_0 = arith.constant 0 : i32
    return %arg0, %c0_i32 : i32, i32
  }
  func.func @transform_1(%arg0: i32) -> (i32, i32) {
    %c0_i32 = arith.constant 0 : i32
    %c0_i32_0 = arith.constant 0 : i32
    return %arg0, %c0_i32 : i32, i32
  }
  func.func @transform_2(%arg0: i32) -> (i32, i32, i32) {
    %c0_i32 = arith.constant 0 : i32
    %c0_i32_0 = arith.constant 0 : i32
    %c0_i32_1 = arith.constant 0 : i32
    return %arg0, %c0_i32, %c0_i32_0 : i32, i32, i32
  }
}

</mosaic_0001>

<llo_original>
// kernel: tpu_custom_call.1
$region0: #{tpu_custom_call.1}
  #allocation0 [shape = 'u32[]', space=smem, size = 0x4, offset = 0x4, fixed_abs, tag = 'smem constant byte address 0x4 - core index']
  #allocation1 [shape = 'u32[72,128]{1,0:T(1,128)}', space=vmem, size = 0x9000, scoped, tag = 'internal scratch']
  %s0 = inlined_call_operand.vmem [shape: f32[16,128], index: 0, kind: input, shape index: {}]
  %s1 = inlined_call_operand.vmem [shape: s32[16,1], index: 1, kind: input, shape index: {}]
  %s2 = inlined_call_operand.vmem [shape: f32[2,1,1], index: 2, kind: output, shape index: {}]
  %s3 = sld [smem:[#allocation0]]
  $region41: #{tpu_custom_call.1} parent=0
    _
  %s5 = ssub.s32 1, %s3
  %s6 = scalar_select 0, %s5, %s3
  loop: start=0, step=1, limit=4
  $region2: #{tpu_custom_call.1} parent=0 // loop_pre_header
    _
  $region3: #{tpu_custom_call.1} parent=0 // loop_header
    %s8 = sphi 0, %s12
    %p9 = scmp.ge.s32.totalorder %s8, 4
    %s18 = sphi 0, %s20
    %s21 = sphi 0, %s18
    %s22 = sphi 0, %s21
    %s38 = sphi 0, %s22
    %s44 = sphi 0, %s46
    %s47 = sphi 0, %s44
    %s48 = sphi 0, %s47
    %s64 = sphi 0, %s48
    %s70 = sphi 0, %s72
    %s73 = sphi 0, %s70
    %s74 = sphi 0, %s73
    %s90 = sphi 0, %s74
  $region4: #{tpu_custom_call.1} parent=0 // loop_header_branch
    %11 = sbr.rel (%p9) target = $region8
  $region5: #{tpu_custom_call.1} parent=0 // loop_body
    %s13 = ssub.s32 %s8, 1
    %s14 = ssub.s32 %s8, 2
    %s15 = sadd.s32 %s8, 1
    %s16 = ssub.s32 %s8, %s15
    %p17 = scmp.eq.s32.totalorder %s16, 0
    %s19 = sadd.s32 %s18, 1
    %s20 = scalar_select %p17, %s18, %s19
    %p23 = pneg %p17
    %p24 = scmp.eq.s32.totalorder %s8, 1
    %p25 = por %p23, %p24
    %p26 = scmp.ne.s32.totalorder %s18, %s21
    %p27 = scmp.eq.s32.totalorder %s8, 0
    %p28 = por %p26, %p27
    %p29 = scmp.ne.s32.totalorder %s18, %s21
    %p30 = scmp.eq.s32.totalorder %s13, 1
    %p31 = por %p29, %p30
    %p32 = scmp.ne.s32.totalorder %s21, %s22
    %p33 = scmp.eq.s32.totalorder %s13, 0
    %p34 = por %p32, %p33
    %p35 = scmp.ne.s32.totalorder %s21, %s22
    %p36 = scmp.eq.s32.totalorder %s14, 1
    %p37 = por %p35, %p36
    %p39 = scmp.ne.s32.totalorder %s22, %s38
    %p40 = scmp.eq.s32.totalorder %s14, 0
    %p41 = por %p39, %p40
    %s42 = ssub.s32 %s8, %s15
    %p43 = scmp.eq.s32.totalorder %s42, 0
    %s45 = sadd.s32 %s44, 1
    %s46 = scalar_select %p43, %s44, %s45
    %p49 = pneg %p43
    %p50 = scmp.eq.s32.totalorder %s8, 1
    %p51 = por %p49, %p50
    %p52 = scmp.ne.s32.totalorder %s44, %s47
    %p53 = scmp.eq.s32.totalorder %s8, 0
    %p54 = por %p52, %p53
    %p55 = scmp.ne.s32.totalorder %s44, %s47
    %p56 = scmp.eq.s32.totalorder %s13, 1
    %p57 = por %p55, %p56
    %p58 = scmp.ne.s32.totalorder %s47, %s48
    %p59 = scmp.eq.s32.totalorder %s13, 0
    %p60 = por %p58, %p59
    %p61 = scmp.ne.s32.totalorder %s47, %s48
    %p62 = scmp.eq.s32.totalorder %s14, 1
    %p63 = por %p61, %p62
    %p65 = scmp.ne.s32.totalorder %s48, %s64
    %p66 = scmp.eq.s32.totalorder %s14, 0
    %p67 = por %p65, %p66
    %s68 = ssub.s32 %s8, %s15
    %p69 = scmp.eq.s32.totalorder %s68, 0
    %s71 = sadd.s32 %s70, 1
    %s72 = scalar_select %p69, %s70, %s71
    %p75 = pneg %p69
    %p76 = scmp.eq.s32.totalorder %s8, 1
    %p77 = por %p75, %p76
    %p78 = scmp.ne.s32.totalorder %s70, %s73
    %p79 = scmp.eq.s32.totalorder %s8, 0
    %p80 = por %p78, %p79
    %p81 = scmp.ne.s32.totalorder %s70, %s73
    %p82 = scmp.eq.s32.totalorder %s13, 1
    %p83 = por %p81, %p82
    %p84 = scmp.ne.s32.totalorder %s73, %s74
    %p85 = scmp.eq.s32.totalorder %s13, 0
    %p86 = por %p84, %p85
    %p87 = scmp.ne.s32.totalorder %s73, %s74
    %p88 = scmp.eq.s32.totalorder %s14, 1
    %p89 = por %p87, %p88
    %p91 = scmp.ne.s32.totalorder %s74, %s90
    %p92 = scmp.eq.s32.totalorder %s14, 0
    %p93 = por %p91, %p92
    %p94 = scmp.le.s32.totalorder 1, %s8
    %p95 = scmp.lt.s32.totalorder %s8, 3
    %p96 = pnand %p94, %p95
    %p97 = pneg %p96
    // Predicated region
    $region9: #{tpu_custom_call.1} parent=5 // pred_check
      _
    $region10: #{tpu_custom_call.1} parent=5 // pred_check_branch
      %99 = sbr.rel (%p96) target = $region12
    $region11: #{tpu_custom_call.1} parent=5 // pred_region
      %s100 = ssub.s32 %s8, 1
    $region12: #{tpu_custom_call.1} parent=5 // pred_fallthru
      _
    %p101 = scmp.lt.s32.totalorder %s8, 2
    // Predicated region
    $region13: #{tpu_custom_call.1} parent=5 // pred_check
      %p102 = pneg %p101
    $region14: #{tpu_custom_call.1} parent=5 // pred_check_branch
      %104 = sbr.rel (%p102) target = $region16
    $region15: #{tpu_custom_call.1} parent=5 // pred_region
      // Predicated region
      $region17: #{tpu_custom_call.1} parent=15 // pred_check
        %p105 = pneg %p28
      $region18: #{tpu_custom_call.1} parent=15 // pred_check_branch
        %107 = sbr.rel (%p105) target = $region20
      $region19: #{tpu_custom_call.1} parent=15 // pred_region
        %p108 = scmp.lt.s32.totalorder %s8, 1
        %s109 = scalar_select %p108, %s8, 1
        %s110 = smul.addr %s109, 8
        %s111 = scalar_lea.vmem %s0, %s110
      $region20: #{tpu_custom_call.1} parent=15 // pred_fallthru
        _
      // Predicated region
      $region21: #{tpu_custom_call.1} parent=15 // pred_check
        %p112 = pneg %p54
      $region22: #{tpu_custom_call.1} parent=15 // pred_check_branch
        %114 = sbr.rel (%p112) target = $region24
      $region23: #{tpu_custom_call.1} parent=15 // pred_region
        %p115 = scmp.lt.s32.totalorder %s8, 1
        %s116 = scalar_select %p115, %s8, 1
        %s117 = smul.addr %s116, 8
        %s118 = scalar_lea.vmem %s1, %s117
      $region24: #{tpu_custom_call.1} parent=15 // pred_fallthru
        _
    $region16: #{tpu_custom_call.1} parent=5 // pred_fallthru
      _
    %p119 = scmp.le.s32.totalorder 1, %s8
    %p120 = scmp.lt.s32.totalorder %s8, 3
    %p121 = pnand %p119, %p120
    %p122 = pneg %p121
    // Predicated region
    $region25: #{tpu_custom_call.1} parent=5 // pred_check
      _
    $region26: #{tpu_custom_call.1} parent=5 // pred_check_branch
      %124 = sbr.rel (%p121) target = $region28
    $region27: #{tpu_custom_call.1} parent=5 // pred_region
      %s125 = ssub.s32 %s8, 1
      %p126 = scmp.lt.s32.totalorder %s13, 1
      %s127 = scalar_select %p126, %s13, 1
      %s128 = smul.addr %s127, 8
      %s129 = scalar_lea.vmem %s0, %s128
      %p130 = pneg %p34
      %p131 = pneg %p31
      %p132 = scmp.lt.s32.totalorder %s13, 1
      %s133 = scalar_select %p132, %s13, 1
      %s134 = smul.addr %s133, 8
      %s135 = scalar_lea.vmem %s1, %s134
      %p136 = pneg %p60
      %p137 = pneg %p57
      %p138 = pneg %p86
      %p139 = pneg %p83
      %p140 = scmp.lt.s32.totalorder %s13, 1
      %s141 = scalar_select %p140, %s13, 1
      %s142 = scalar_lea.vmem %s2, %s141
      %p143 = scmp.lt.s32.totalorder %s13, 1
      %s144 = scalar_select %p143, %s13, 1
      %s145 = smul.addr %s144, 8
      %s146 = scalar_lea.vmem %s0, %s145
      %p147 = scmp.lt.s32.totalorder %s13, 1
      %s148 = scalar_select %p147, %s13, 1
      %s149 = smul.addr %s148, 8
      %s150 = scalar_lea.vmem %s1, %s149
      %p151 = scmp.lt.s32.totalorder %s13, 1
      %s152 = scalar_select %p151, %s13, 1
      %s153 = scalar_lea.vmem %s2, %s152
      %v154 = vld [vmem:[%s146] sm:$0xff]
      %v155 = vld [vmem:[%s150] sm:$0xff]
      %156 = vmax.xlane.f32.xlu0 %v154
      %v157 = vpop.xlane.xlu0 %156
      %158 = vadd.xlane.f32.xlu0 %v154
      %v159 = vpop.xlane.xlu0 %158
      %v160 = vlaneseq
      %v161 = vand.u32 %v160, 127
      %162 = vset.pattern.permute.xlu0 0
      %163 = vperm.xlu0 %162, %v155
      %v164 = vpop.permute.xlu0 %163
      %vm165 = vcmp.eq.s32.totalorder %v161, %v164
      %v166 = vsel %vm165, %v154, 0.0
      %167 = vadd.xlane.f32.xlu0 %v166
      %v168 = vpop.xlane.xlu0 %167
      %v169 = vsub.f32 %v154, %v157
      %v170 = vmul.f32 %v169, 1.442695
      %v171 = vpow.pop %v170
      %172 = vadd.xlane.f32.xlu0 %v171
      %v173 = vpop.xlane.xlu0 %172
      %v174 = vlog2.pop %v173
      %v175 = vmul.f32 %v174, 0.6931472
      %v176 = vmul.f32 %v157, 128.0
      %v177 = vsub.f32 %v159, %v176
      %v178 = vmul.f32 %v175, 128.0
      %v179 = vsub.f32 %v177, %v178
      %v180 = vsub.f32 %v168, %v157
      %v181 = vsub.f32 %v180, %v175
      %v182 = vmul.f32 %v179, 0.0007936508
      %v183 = vmul.f32 %v181, 0.89920634
      %v184 = vadd.f32 %v182, %v183
      %v185 = vsub.f32 0.0, %v184
      %s186 = smul.u32 %s13, 8
      %v187 = vlaneseq
      %v188 = vshrl.u32 %v187, 7
      %v189 = vstv %s186
      %v190 = vadd.s32 %v189, %v188
      %vm191 = vcmp.lt.s32.totalorder %v190, 16
      %vm192 = vcmp.ne.s32.totalorder %v155, 4294967196
      %vm193 = vmand %vm191, %vm192
      %v194 = vsel %vm193, %v185, 0.0
      %vm195 = vcmask 7168
      %v196 = vsel %vm195, %v194, 0.0
      %197 = vadd.xlane.f32.xlu0 %v196
      %v198 = vpop.xlane.xlu0 %197
      %v199 = vrot.slane %v198, 4
      %v200 = vadd.f32 %v198, %v199
      %v201 = vrot.slane %v200, 2
      %v202 = vadd.f32 %v200, %v201
      %v203 = vrot.slane %v202, 1
      %v204 = vadd.f32 %v202, %v203
      %s205 = vtos %v204
      %v206 = vstv %s205
      %vm207 = vcmask 0
      %208 = vst.msk [vmem:[%s153] sm:$0x1] %vm207, %v206
      %p209 = scmp.lt.s32.totalorder %s13, 1
      %s210 = scalar_select %p209, %s13, 1
      %s211 = scalar_lea.vmem %s2, %s210
      // Predicated region
      $region29: #{tpu_custom_call.1} parent=27 // pred_check
        %p212 = pneg %p83
      $region30: #{tpu_custom_call.1} parent=27 // pred_check_branch
        %214 = sbr.rel (%p212) target = $region32
      $region31: #{tpu_custom_call.1} parent=27 // pred_region
        _
      $region32: #{tpu_custom_call.1} parent=27 // pred_fallthru
        _
    $region28: #{tpu_custom_call.1} parent=5 // pred_fallthru
      _
    %p215 = scmp.le.s32.totalorder 2, %s8
    // Predicated region
    $region33: #{tpu_custom_call.1} parent=5 // pred_check
      %p216 = pneg %p215
    $region34: #{tpu_custom_call.1} parent=5 // pred_check_branch
      %218 = sbr.rel (%p216) target = $region36
    $region35: #{tpu_custom_call.1} parent=5 // pred_region
      %s219 = ssub.s32 %s8, 2
      // Predicated region
      $region37: #{tpu_custom_call.1} parent=35 // pred_check
        %p220 = pneg %p89
      $region38: #{tpu_custom_call.1} parent=35 // pred_check_branch
        %222 = sbr.rel (%p220) target = $region40
      $region39: #{tpu_custom_call.1} parent=35 // pred_region
        %p223 = scmp.lt.s32.totalorder %s14, 1
        %s224 = scalar_select %p223, %s14, 1
        %s225 = scalar_lea.vmem %s2, %s224
      $region40: #{tpu_custom_call.1} parent=35 // pred_fallthru
        _
    $region36: #{tpu_custom_call.1} parent=5 // pred_fallthru
      _
  $region6: #{tpu_custom_call.1} parent=0 // loop_footer
    %s12 = sadd.s32 1, %s8
  $region7: #{tpu_custom_call.1} parent=0 // loop_footer_branch
    %7 = sbr.rel target = $region3
  $region8: #{tpu_custom_call.1} parent=0 // loop_exit
    _

</llo_original>
